<compile_context>
chip_gen: v5e
topology: v5e:2x2
jax: 0.10.0
libtpu: 0.0.40
codegen_flags: <defaults>
</compile_context>

<pallas_src>
import jax
import jax.numpy as jnp
from jax.experimental import pallas as pl
from jax.experimental.pallas import tpu as pltpu


def _round_up(x, m):
    return ((x + m - 1) // m) * m


def _round_down(x, m):
    return (x // m) * m


# --------------------------------------------------------------------------
# Kernel
# --------------------------------------------------------------------------
def _ppo_fused_kernel(x_ref, w1_ref, w23_ref, w4_ref, b123_ref, b4_ref, out_ref):
    """Fused (actor || critic) 4-layer MLP on one (tb, K0) batch tile.

    x_ref    : (tb, K0)   compute dtype, zero-padded input tile
    w1_ref   : (K0, H)    compute dtype, layer-1 weights [actor | critic]
    w23_ref  : (2, H, H)  compute dtype, block-diagonal hidden layers 2-3
    w4_ref   : (H, O)     compute dtype, head weights (mu columns | value col)
    b123_ref : (3, 1, H)  f32 biases for layers 1-3
    b4_ref   : (1, O)     f32 bias for layer 4
    out_ref  : (tb, O)    f32 output slab: [mu | value | zero-pad]
    """
    cdt = w1_ref.dtype
    # Layer 1: shared input -> concatenated actor/critic hidden. f32 accumulate.
    h = jnp.dot(x_ref[...], w1_ref[...], preferred_element_type=jnp.float32)
    h = jnp.maximum(h + b123_ref[0], 0.0)
    # Layers 2-3: block-diagonal hidden layers. Activations stay f32; only the
    # MXU operand is cast to the compute dtype.
    for l in range(2):
        h = jnp.dot(h.astype(cdt), w23_ref[l],
                    preferred_element_type=jnp.float32)
        h = jnp.maximum(h + b123_ref[l + 1], 0.0)
    # Layer 4 heads: columns [0:num_outputs] -> mu, column num_outputs -> value.
    out = jnp.dot(h.astype(cdt), w4_ref[...],
                  preferred_element_type=jnp.float32) + b4_ref[...]
    out_ref[...] = out.astype(out_ref.dtype)


# --------------------------------------------------------------------------
# Parameter packing (done once, outside the per-step call)
# --------------------------------------------------------------------------
def pack_params(params, compute_dtype=jnp.bfloat16):
    """Fuse actor+critic layers and pack them into per-layer padded slabs.

    Default compute_dtype=bfloat16 (fast MXU operands on v5e/v6e/v7x);
    accumulation, biases and inter-layer activations stay f32 in the kernel.
    """
    actor, critic, std = params["actor"], params["critic"], params["std"]
    num_inputs = actor[0][0].shape[0]
    hidden = actor[0][0].shape[1]
    num_outputs = actor[-1][0].shape[1]
    fused_out = num_outputs + 1                       # [mu | value]

    K0 = _round_up(num_inputs, 128)                   # input feature pad
    H = _round_up(2 * hidden, 128)                    # fused hidden pad
    O = _round_up(fused_out, 128)                     # fused head pad

    f32 = jnp.float32

    def block_diag(a, b):
        k1, n1 = a.shape
        k2, n2 = b.shape
        out = jnp.zeros((k1 + k2, n1 + n2), f32)
        return out.at[:k1, :n1].set(a).at[k1:, n1:].set(b)

    # Layer 1: shared input, concatenated [actor | critic] output columns.
    w1 = jnp.zeros((K0, H), f32).at[:num_inputs, :2 * hidden].set(
        jnp.concatenate([actor[0][0], critic[0][0]], axis=1))
    b1 = jnp.zeros((1, H), f32).at[:, :2 * hidden].set(
        jnp.concatenate([actor[0][1], critic[0][1]], axis=1))

    # Layers 2-3: block-diagonal (actor top-left, critic bottom-right).
    w23 = jnp.zeros((2, H, H), f32)
    b23 = jnp.zeros((2, 1, H), f32)
    for l in range(2):
        w23 = w23.at[l, :2 * hidden, :2 * hidden].set(
            block_diag(actor[l + 1][0], critic[l + 1][0]))
        b23 = b23.at[l, :, :2 * hidden].set(
            jnp.concatenate([actor[l + 1][1], critic[l + 1][1]], axis=1))

    # Layer 4: heads. Columns [0:num_outputs] -> mu, column num_outputs -> value.
    w4 = jnp.zeros((H, O), f32).at[:2 * hidden, :fused_out].set(
        block_diag(actor[3][0], critic[3][0]))
    b4 = jnp.zeros((1, O), f32).at[:, :fused_out].set(
        jnp.concatenate([actor[3][1], critic[3][1]], axis=1))

    b123 = jnp.concatenate([b1[None], b23], axis=0)   # (3, 1, H) f32

    cdt = jnp.dtype(compute_dtype)
    return {
        "w1": w1.astype(cdt), "w23": w23.astype(cdt), "w4": w4.astype(cdt),
        "b123": b123, "b4": b4,                       # biases stay f32
        "std": std,
        "num_inputs": num_inputs, "num_outputs": num_outputs,
        "hidden_units": hidden, "K0": K0, "H": H, "O": O,
        "compute_dtype": cdt,
    }


# --------------------------------------------------------------------------
# Tile / VMEM sizing
# --------------------------------------------------------------------------
def _vmem_capacity_bytes():
    try:
        return int(pltpu.get_tpu_info().vmem_capacity_bytes)
    except Exception:
        return 64 << 20      # conservative: v7x per-TensorCore VMEM


def _choose_batch_tile(batch, sublane, tile_row_bytes, resident_bytes,
                       vmem_cap, requested=None):
    if requested is not None:
        return max(sublane, _round_up(requested, sublane))
    # Budget for the double-buffered x/out tiles; weights are resident once.
    budget = int(vmem_cap * 0.75) - resident_bytes - (4 << 20)
    max_rows = max(sublane,
                   _round_down(max(budget, 0) // (2 * tile_row_bytes), sublane))
    hard_cap = 4096 if vmem_cap > (64 << 20) else 2048
    tb = min(_round_up(batch, sublane), hard_cap, max_rows)
    # Keep >=2 grid steps when there is enough work so v7x's two TensorCores
    # (dimension_semantics="parallel") both get tiles.
    if batch >= 2 * sublane:
        tb = min(tb, _round_up(pl.cdiv(batch, 2), sublane))
    return max(tb, sublane)


def _build_specs(tb, K0, H, O, weight_buffers):
    def resident(shape):
        zeros = (0,) * len(shape)
        if weight_buffers is None:
            return pl.BlockSpec(shape, lambda i: zeros)
        return pl.BlockSpec(shape, lambda i: zeros,
                            pipeline_mode=pl.Buffered(weight_buffers))

    in_specs = [
        pl.BlockSpec((tb, K0), lambda i: (i, 0)),   # x batch tile
        resident((K0, H)),                          # W1
        resident((2, H, H)),                        # W2, W3
        resident((H, O)),                           # W4 (heads)
        resident((3, 1, H)),                        # b1..b3 (f32)
        resident((1, O)),                           # b4 (f32)
    ]
    out_specs = pl.BlockSpec((tb, O), lambda i: (i, 0))
    return in_specs, out_specs


# --------------------------------------------------------------------------
# Forward wrapper
# --------------------------------------------------------------------------
def ppo_forward(state, packed, *, batch_tile=None):
    """Fused actor/critic forward. Returns (mu, std, value)."""
    batch, num_inputs = state.shape
    assert num_inputs == packed["num_inputs"]
    num_outputs = packed["num_outputs"]
    K0, H, O = packed["K0"], packed["H"], packed["O"]
    cdt = packed["compute_dtype"]
    itemsize = cdt.itemsize

    # Sublane multiple for the compute dtype: (8,128) f32 tiles, (16,128) bf16.
    sublane = 8 * (4 // itemsize)

    resident_bytes = ((K0 * H + 2 * H * H + H * O) * itemsize
                      + (3 * H + O) * 4)
    tile_row_bytes = K0 * itemsize + O * 4           # x row in + out row (f32)
    vmem_cap = _vmem_capacity_bytes()

    tb = _choose_batch_tile(batch, sublane, tile_row_bytes, resident_bytes,
                            vmem_cap, batch_tile)
    padded_batch = _round_up(batch, tb)
    num_tiles = padded_batch // tb

    # Input slab padded only to K0 and the batch-tile multiple, cast to the
    # compute dtype. Zero feature padding x zero weight padding keeps the math
    # unchanged; zero batch rows are sliced off after the kernel.
    x = state.astype(cdt)
    if padded_batch != batch or K0 != num_inputs:
        x = jnp.pad(x, ((0, padded_batch - batch), (0, K0 - num_inputs)))

    flops = 2 * padded_batch * (K0 * H + 2 * H * H + H * O)
    bytes_accessed = padded_batch * tile_row_bytes + resident_bytes

    # Resident weights (single-buffered) + double-buffered x/out tiles +
    # compiler scratch headroom; capped at ~75% of this generation's VMEM
    # (48 MiB on v7x's 64 MiB, 96 MiB on v5e/v6e's 128 MiB).
    vmem_limit = int(resident_bytes + 2 * tb * tile_row_bytes + (4 << 20))
    vmem_limit = max(vmem_limit, 32 << 20)
    vmem_limit = min(vmem_limit, int(vmem_cap * 0.75))

    args = (x, packed["w1"], packed["w23"], packed["w4"],
            packed["b123"], packed["b4"])

    out = None
    last_err = None
    # Prefer single-buffered resident weights (constant index_map -> a second
    # pipeline buffer is pure VMEM waste). Fall back to default buffering if
    # this jax build rejects pipeline_mode on the top-level pallas_call.
    for weight_buffers in (1, None):
        try:
            in_specs, out_specs = _build_specs(tb, K0, H, O, weight_buffers)
            out = pl.pallas_call(
                _ppo_fused_kernel,
                out_shape=jax.ShapeDtypeStruct((padded_batch, O), jnp.float32),
                grid=(num_tiles,),
                in_specs=in_specs,
                out_specs=out_specs,
                compiler_params=pltpu.CompilerParams(
                    dimension_semantics=("parallel",),
                    vmem_limit_bytes=vmem_limit),
                cost_estimate=pl.CostEstimate(
                    flops=flops, transcendentals=0,
                    bytes_accessed=bytes_accessed),
            )(*args)
            break
        except Exception as err:   # noqa: BLE001 - pipeline_mode fallback
            last_err = err
    if out is None:
        raise last_err

    mu = out[:batch, :num_outputs]
    value = out[:batch, num_outputs:num_outputs + 1]
    # std is a constant broadcast of the (1, num_outputs) parameter; Normal(mu,
    # std) is fully determined by (mu, std), so no kernel writeback is needed.
    std = jnp.broadcast_to(packed["std"], mu.shape)
    return mu, std, value


# --------------------------------------------------------------------------
# Init + pure-JAX reference (PyTorch semantics)
# --------------------------------------------------------------------------
def init_params(key, num_inputs, num_outputs, hidden_units, std=1.0):
    """Deterministic init mimicking PyTorch nn.Linear defaults.
    Weights are stored (in_features, out_features) so forward is x @ W + b."""
    def linear(key, fan_in, fan_out):
        kw, kb = jax.random.split(key)
        bound = 1.0 / jnp.sqrt(fan_in)
        w = jax.random.uniform(kw, (fan_in, fan_out), jnp.float32, -bound, bound)
        b = jax.random.uniform(kb, (1, fan_out), jnp.float32, -bound, bound)
        return w, b

    keys = jax.random.split(key, 8)
    critic = [
        linear(keys[0], num_inputs, hidden_units),
        linear(keys[1], hidden_units, hidden_units),
        linear(keys[2], hidden_units, hidden_units),
        linear(keys[3], hidden_units, 1),
    ]
    actor = [
        linear(keys[4], num_inputs, hidden_units),
        linear(keys[5], hidden_units, hidden_units),
        linear(keys[6], hidden_units, hidden_units),
        linear(keys[7], hidden_units, num_outputs),
    ]
    std_param = jnp.ones((1, num_outputs), jnp.float32) * std
    return {"critic": critic, "actor": actor, "std": std_param}


def _reference_forward(state, params):
    def mlp(x, layers):
        for i, (w, b) in enumerate(layers):
            x = x @ w + b
            if i < len(layers) - 1:
                x = jnp.maximum(x, 0.0)
        return x
    value = mlp(state, params["critic"])
    mu = mlp(state, params["actor"])
    std = jnp.broadcast_to(params["std"], mu.shape)
    return mu, std, value


if __name__ == "__main__":
    num_inputs, num_outputs, hidden_units = 16, 4, 32
    batch = 8

    key = jax.random.PRNGKey(0)
    kp, kx = jax.random.split(key)
    params = init_params(kp, num_inputs, num_outputs, hidden_units, std=1.0)
    state = jax.random.normal(kx, (batch, num_inputs), jnp.float32)

    mu_ref, std_ref, value_ref = _reference_forward(state, params)

    # Default bf16 MXU-operand path (f32 accumulate / f32 activations).
    packed_bf16 = pack_params(params)           # compute_dtype defaults to bf16
    mu16, std16, value16 = ppo_forward(state, packed_bf16)
    jax.block_until_ready((mu16, std16, value16))
    assert mu16.shape == (batch, num_outputs)
    assert std16.shape == (batch, num_outputs)
    assert value16.shape == (batch, 1)
    assert jnp.allclose(mu16, mu_ref, atol=5e-2, rtol=5e-2)
    assert jnp.allclose(std16, std_ref, atol=1e-6)
    assert jnp.allclose(value16, value_ref, atol=5e-2, rtol=5e-2)

    # f32 path (tight tolerance; available for policies that demand it).
    packed_f32 = pack_params(params, compute_dtype=jnp.float32)
    mu, std, value = ppo_forward(state, packed_f32)
    jax.block_until_ready((mu, std, value))
    assert jnp.allclose(mu, mu_ref, atol=1e-5)
    assert jnp.allclose(std, std_ref, atol=1e-6)
    assert jnp.allclose(value, value_ref, atol=1e-5)

    print("KERNEL_OK")
</pallas_src>

<mosaic_0001>
module attributes {stable_mosaic.version = 11 : i64} {
  func.func @_ppo_fused_kernel(%arg0: i32, %arg1: memref<16x128xbf16, #tpu.memory_space<vmem>>, %arg2: memref<128x128xbf16, #tpu.memory_space<vmem>>, %arg3: memref<2x128x128xbf16, #tpu.memory_space<vmem>>, %arg4: memref<128x128xbf16, #tpu.memory_space<vmem>>, %arg5: memref<3x1x128xf32, #tpu.memory_space<vmem>>, %arg6: memref<1x128xf32, #tpu.memory_space<vmem>>, %arg7: memref<16x128xf32, #tpu.memory_space<vmem>>) attributes {dimension_semantics = [#tpu.dimension_semantics<parallel>], iteration_bounds = array<i64: 1>, scalar_prefetch = 0 : i64, scratch_operands = 0 : i64, tpu.core_type = #tpu.core_type<tc>, window_params = [{transform_indices = @transform_0, window_bounds = array<i64: 16, 128>}, {pipeline_mode = #tpu.pipeline_mode<synchronous>, transform_indices = @transform_1, window_bounds = array<i64: 128, 128>}, {pipeline_mode = #tpu.pipeline_mode<synchronous>, transform_indices = @transform_2, window_bounds = array<i64: 2, 128, 128>}, {pipeline_mode = #tpu.pipeline_mode<synchronous>, transform_indices = @transform_3, window_bounds = array<i64: 128, 128>}, {pipeline_mode = #tpu.pipeline_mode<synchronous>, transform_indices = @transform_4, window_bounds = array<i64: 3, 1, 128>}, {pipeline_mode = #tpu.pipeline_mode<synchronous>, transform_indices = @transform_5, window_bounds = array<i64: 1, 128>}, {transform_indices = @transform_6, window_bounds = array<i64: 16, 128>}]} {
    %c0 = arith.constant 0 : index
    %c0_0 = arith.constant 0 : index
    %0 = vector.load %arg1[%c0, %c0_0] : memref<16x128xbf16, #tpu.memory_space<vmem>>, vector<16x128xbf16>
    %c0_1 = arith.constant 0 : index
    %c0_2 = arith.constant 0 : index
    %1 = vector.load %arg2[%c0_1, %c0_2] : memref<128x128xbf16, #tpu.memory_space<vmem>>, vector<128x128xbf16>
    %cst = arith.constant dense<0.000000e+00> : vector<16x128xf32>
    %2 = tpu.matmul %0, %1, %cst {dimension_numbers = #tpu.dot_dimension_numbers<[1], [0], [0], [1], [0, 0, 1, 1], [], []>} : vector<16x128xbf16>, vector<128x128xbf16>, vector<16x128xf32> -> vector<16x128xf32>
    %c0_3 = arith.constant 0 : index
    %c0_4 = arith.constant 0 : index
    %c0_5 = arith.constant 0 : index
    %3 = vector.load %arg5[%c0_3, %c0_4, %c0_5] : memref<3x1x128xf32, #tpu.memory_space<vmem>>, vector<1x1x128xf32>
    %4 = vector.shape_cast %3 : vector<1x1x128xf32> to vector<1x128xf32>
    %5 = vector.broadcast %4 : vector<1x128xf32> to vector<16x128xf32>
    %6 = arith.addf %2, %5 : vector<16x128xf32>
    %cst_6 = arith.constant 0.000000e+00 : f32
    %7 = vector.broadcast %cst_6 : f32 to vector<16x128xf32>
    %8 = arith.maximumf %6, %7 : vector<16x128xf32>
    %9 = arith.truncf %8 : vector<16x128xf32> to vector<16x128xbf16>
    %c0_7 = arith.constant 0 : index
    %c0_8 = arith.constant 0 : index
    %c0_9 = arith.constant 0 : index
    %10 = vector.load %arg3[%c0_7, %c0_8, %c0_9] : memref<2x128x128xbf16, #tpu.memory_space<vmem>>, vector<1x128x128xbf16>
    %11 = vector.shape_cast %10 : vector<1x128x128xbf16> to vector<128x128xbf16>
    %cst_10 = arith.constant dense<0.000000e+00> : vector<16x128xf32>
    %12 = tpu.matmul %9, %11, %cst_10 {dimension_numbers = #tpu.dot_dimension_numbers<[1], [0], [0], [1], [0, 0, 1, 1], [], []>} : vector<16x128xbf16>, vector<128x128xbf16>, vector<16x128xf32> -> vector<16x128xf32>
    %c1 = arith.constant 1 : index
    %c0_11 = arith.constant 0 : index
    %c0_12 = arith.constant 0 : index
    %13 = vector.load %arg5[%c1, %c0_11, %c0_12] : memref<3x1x128xf32, #tpu.memory_space<vmem>>, vector<1x1x128xf32>
    %14 = vector.shape_cast %13 : vector<1x1x128xf32> to vector<1x128xf32>
    %15 = vector.broadcast %14 : vector<1x128xf32> to vector<16x128xf32>
    %16 = arith.addf %12, %15 : vector<16x128xf32>
    %cst_13 = arith.constant 0.000000e+00 : f32
    %17 = vector.broadcast %cst_13 : f32 to vector<16x128xf32>
    %18 = arith.maximumf %16, %17 : vector<16x128xf32>
    %19 = arith.truncf %18 : vector<16x128xf32> to vector<16x128xbf16>
    %c1_14 = arith.constant 1 : index
    %c0_15 = arith.constant 0 : index
    %c0_16 = arith.constant 0 : index
    %20 = vector.load %arg3[%c1_14, %c0_15, %c0_16] : memref<2x128x128xbf16, #tpu.memory_space<vmem>>, vector<1x128x128xbf16>
    %21 = vector.shape_cast %20 : vector<1x128x128xbf16> to vector<128x128xbf16>
    %cst_17 = arith.constant dense<0.000000e+00> : vector<16x128xf32>
    %22 = tpu.matmul %19, %21, %cst_17 {dimension_numbers = #tpu.dot_dimension_numbers<[1], [0], [0], [1], [0, 0, 1, 1], [], []>} : vector<16x128xbf16>, vector<128x128xbf16>, vector<16x128xf32> -> vector<16x128xf32>
    %c2 = arith.constant 2 : index
    %c0_18 = arith.constant 0 : index
    %c0_19 = arith.constant 0 : index
    %23 = vector.load %arg5[%c2, %c0_18, %c0_19] : memref<3x1x128xf32, #tpu.memory_space<vmem>>, vector<1x1x128xf32>
    %24 = vector.shape_cast %23 : vector<1x1x128xf32> to vector<1x128xf32>
    %25 = vector.broadcast %24 : vector<1x128xf32> to vector<16x128xf32>
    %26 = arith.addf %22, %25 : vector<16x128xf32>
    %cst_20 = arith.constant 0.000000e+00 : f32
    %27 = vector.broadcast %cst_20 : f32 to vector<16x128xf32>
    %28 = arith.maximumf %26, %27 : vector<16x128xf32>
    %29 = arith.truncf %28 : vector<16x128xf32> to vector<16x128xbf16>
    %c0_21 = arith.constant 0 : index
    %c0_22 = arith.constant 0 : index
    %30 = vector.load %arg4[%c0_21, %c0_22] : memref<128x128xbf16, #tpu.memory_space<vmem>>, vector<128x128xbf16>
    %cst_23 = arith.constant dense<0.000000e+00> : vector<16x128xf32>
    %31 = tpu.matmul %29, %30, %cst_23 {dimension_numbers = #tpu.dot_dimension_numbers<[1], [0], [0], [1], [0, 0, 1, 1], [], []>} : vector<16x128xbf16>, vector<128x128xbf16>, vector<16x128xf32> -> vector<16x128xf32>
    %c0_24 = arith.constant 0 : index
    %c0_25 = arith.constant 0 : index
    %32 = vector.load %arg6[%c0_24, %c0_25] : memref<1x128xf32, #tpu.memory_space<vmem>>, vector<1x128xf32>
    %33 = vector.broadcast %32 : vector<1x128xf32> to vector<16x128xf32>
    %34 = arith.addf %31, %33 : vector<16x128xf32>
    %c0_26 = arith.constant 0 : index
    %c0_27 = arith.constant 0 : index
    %35 = vector.load %arg7[%c0_26, %c0_27] : memref<16x128xf32, #tpu.memory_space<vmem>>, vector<16x128xf32>
    tpu.vector_store %arg7[%c0_26, %c0_27], %34 {strides = array<i32>} : memref<16x128xf32, #tpu.memory_space<vmem>>, vector<16x128xf32>,
    return
  }
  func.func @transform_0(%arg0: i32) -> (i32, i32) {
    %c0_i32 = arith.constant 0 : i32
    %c0_i32_0 = arith.constant 0 : i32
    return %arg0, %c0_i32 : i32, i32
  }
  func.func @transform_1(%arg0: i32) -> (i32, i32) {
    %c0_i32 = arith.constant 0 : i32
    %c0_i32_0 = arith.constant 0 : i32
    %c0_i32_1 = arith.constant 0 : i32
    return %c0_i32, %c0_i32_0 : i32, i32
  }
  func.func @transform_2(%arg0: i32) -> (i32, i32, i32) {
    %c0_i32 = arith.constant 0 : i32
    %c0_i32_0 = arith.constant 0 : i32
    %c0_i32_1 = arith.constant 0 : i32
    %c0_i32_2 = arith.constant 0 : i32
    return %c0_i32, %c0_i32_0, %c0_i32_1 : i32, i32, i32
  }
  func.func @transform_3(%arg0: i32) -> (i32, i32) {
    %c0_i32 = arith.constant 0 : i32
    %c0_i32_0 = arith.constant 0 : i32
    %c0_i32_1 = arith.constant 0 : i32
    return %c0_i32, %c0_i32_0 : i32, i32
  }
  func.func @transform_4(%arg0: i32) -> (i32, i32, i32) {
    %c0_i32 = arith.constant 0 : i32
    %c0_i32_0 = arith.constant 0 : i32
    %c0_i32_1 = arith.constant 0 : i32
    %c0_i32_2 = arith.constant 0 : i32
    return %c0_i32, %c0_i32_0, %c0_i32_1 : i32, i32, i32
  }
  func.func @transform_5(%arg0: i32) -> (i32, i32) {
    %c0_i32 = arith.constant 0 : i32
    %c0_i32_0 = arith.constant 0 : i32
    %c0_i32_1 = arith.constant 0 : i32
    return %c0_i32, %c0_i32_0 : i32, i32
  }
  func.func @transform_6(%arg0: i32) -> (i32, i32) {
    %c0_i32 = arith.constant 0 : i32
    %c0_i32_0 = arith.constant 0 : i32
    return %arg0, %c0_i32 : i32, i32
  }
}

module attributes {stable_mosaic.version = 11 : i64} {
  func.func @_ppo_fused_kernel(%arg0: i32, %arg1: memref<16x128xbf16, #tpu.memory_space<vmem>>, %arg2: memref<128x128xbf16, #tpu.memory_space<vmem>>, %arg3: memref<2x128x128xbf16, #tpu.memory_space<vmem>>, %arg4: memref<128x128xbf16, #tpu.memory_space<vmem>>, %arg5: memref<3x1x128xf32, #tpu.memory_space<vmem>>, %arg6: memref<1x128xf32, #tpu.memory_space<vmem>>, %arg7: memref<16x128xf32, #tpu.memory_space<vmem>>) attributes {dimension_semantics = [#tpu.dimension_semantics<parallel>], iteration_bounds = array<i64: 1>, scalar_prefetch = 0 : i64, scratch_operands = 0 : i64, tpu.core_type = #tpu.core_type<tc>, window_params = [{transform_indices = @transform_0, window_bounds = array<i64: 16, 128>}, {pipeline_mode = #tpu.pipeline_mode<synchronous>, transform_indices = @transform_1, window_bounds = array<i64: 128, 128>}, {pipeline_mode = #tpu.pipeline_mode<synchronous>, transform_indices = @transform_2, window_bounds = array<i64: 2, 128, 128>}, {pipeline_mode = #tpu.pipeline_mode<synchronous>, transform_indices = @transform_3, window_bounds = array<i64: 128, 128>}, {pipeline_mode = #tpu.pipeline_mode<synchronous>, transform_indices = @transform_4, window_bounds = array<i64: 3, 1, 128>}, {pipeline_mode = #tpu.pipeline_mode<synchronous>, transform_indices = @transform_5, window_bounds = array<i64: 1, 128>}, {transform_indices = @transform_6, window_bounds = array<i64: 16, 128>}]} {
    %c0 = arith.constant 0 : index
    %c0_0 = arith.constant 0 : index
    %0 = vector.load %arg1[%c0, %c0_0] : memref<16x128xbf16, #tpu.memory_space<vmem>>, vector<16x128xbf16>
    %c0_1 = arith.constant 0 : index
    %c0_2 = arith.constant 0 : index
    %1 = vector.load %arg2[%c0_1, %c0_2] : memref<128x128xbf16, #tpu.memory_space<vmem>>, vector<128x128xbf16>
    %cst = arith.constant dense<0.000000e+00> : vector<16x128xf32>
    %2 = tpu.matmul %0, %1, %cst {dimension_numbers = #tpu.dot_dimension_numbers<[1], [0], [0], [1], [0, 0, 1, 1], [], []>} : vector<16x128xbf16>, vector<128x128xbf16>, vector<16x128xf32> -> vector<16x128xf32>
    %c0_3 = arith.constant 0 : index
    %c0_4 = arith.constant 0 : index
    %c0_5 = arith.constant 0 : index
    %3 = vector.load %arg5[%c0_3, %c0_4, %c0_5] : memref<3x1x128xf32, #tpu.memory_space<vmem>>, vector<1x1x128xf32>
    %4 = vector.shape_cast %3 : vector<1x1x128xf32> to vector<1x128xf32>
    %5 = vector.broadcast %4 : vector<1x128xf32> to vector<16x128xf32>
    %6 = arith.addf %2, %5 : vector<16x128xf32>
    %cst_6 = arith.constant 0.000000e+00 : f32
    %7 = vector.broadcast %cst_6 : f32 to vector<16x128xf32>
    %8 = arith.maximumf %6, %7 : vector<16x128xf32>
    %9 = arith.truncf %8 : vector<16x128xf32> to vector<16x128xbf16>
    %c0_7 = arith.constant 0 : index
    %c0_8 = arith.constant 0 : index
    %c0_9 = arith.constant 0 : index
    %10 = vector.load %arg3[%c0_7, %c0_8, %c0_9] : memref<2x128x128xbf16, #tpu.memory_space<vmem>>, vector<1x128x128xbf16>
    %11 = vector.shape_cast %10 : vector<1x128x128xbf16> to vector<128x128xbf16>
    %cst_10 = arith.constant dense<0.000000e+00> : vector<16x128xf32>
    %12 = tpu.matmul %9, %11, %cst_10 {dimension_numbers = #tpu.dot_dimension_numbers<[1], [0], [0], [1], [0, 0, 1, 1], [], []>} : vector<16x128xbf16>, vector<128x128xbf16>, vector<16x128xf32> -> vector<16x128xf32>
    %c1 = arith.constant 1 : index
    %c0_11 = arith.constant 0 : index
    %c0_12 = arith.constant 0 : index
    %13 = vector.load %arg5[%c1, %c0_11, %c0_12] : memref<3x1x128xf32, #tpu.memory_space<vmem>>, vector<1x1x128xf32>
    %14 = vector.shape_cast %13 : vector<1x1x128xf32> to vector<1x128xf32>
    %15 = vector.broadcast %14 : vector<1x128xf32> to vector<16x128xf32>
    %16 = arith.addf %12, %15 : vector<16x128xf32>
    %cst_13 = arith.constant 0.000000e+00 : f32
    %17 = vector.broadcast %cst_13 : f32 to vector<16x128xf32>
    %18 = arith.maximumf %16, %17 : vector<16x128xf32>
    %19 = arith.truncf %18 : vector<16x128xf32> to vector<16x128xbf16>
    %c1_14 = arith.constant 1 : index
    %c0_15 = arith.constant 0 : index
    %c0_16 = arith.constant 0 : index
    %20 = vector.load %arg3[%c1_14, %c0_15, %c0_16] : memref<2x128x128xbf16, #tpu.memory_space<vmem>>, vector<1x128x128xbf16>
    %21 = vector.shape_cast %20 : vector<1x128x128xbf16> to vector<128x128xbf16>
    %cst_17 = arith.constant dense<0.000000e+00> : vector<16x128xf32>
    %22 = tpu.matmul %19, %21, %cst_17 {dimension_numbers = #tpu.dot_dimension_numbers<[1], [0], [0], [1], [0, 0, 1, 1], [], []>} : vector<16x128xbf16>, vector<128x128xbf16>, vector<16x128xf32> -> vector<16x128xf32>
    %c2 = arith.constant 2 : index
    %c0_18 = arith.constant 0 : index
    %c0_19 = arith.constant 0 : index
    %23 = vector.load %arg5[%c2, %c0_18, %c0_19] : memref<3x1x128xf32, #tpu.memory_space<vmem>>, vector<1x1x128xf32>
    %24 = vector.shape_cast %23 : vector<1x1x128xf32> to vector<1x128xf32>
    %25 = vector.broadcast %24 : vector<1x128xf32> to vector<16x128xf32>
    %26 = arith.addf %22, %25 : vector<16x128xf32>
    %cst_20 = arith.constant 0.000000e+00 : f32
    %27 = vector.broadcast %cst_20 : f32 to vector<16x128xf32>
    %28 = arith.maximumf %26, %27 : vector<16x128xf32>
    %29 = arith.truncf %28 : vector<16x128xf32> to vector<16x128xbf16>
    %c0_21 = arith.constant 0 : index
    %c0_22 = arith.constant 0 : index
    %30 = vector.load %arg4[%c0_21, %c0_22] : memref<128x128xbf16, #tpu.memory_space<vmem>>, vector<128x128xbf16>
    %cst_23 = arith.constant dense<0.000000e+00> : vector<16x128xf32>
    %31 = tpu.matmul %29, %30, %cst_23 {dimension_numbers = #tpu.dot_dimension_numbers<[1], [0], [0], [1], [0, 0, 1, 1], [], []>} : vector<16x128xbf16>, vector<128x128xbf16>, vector<16x128xf32> -> vector<16x128xf32>
    %c0_24 = arith.constant 0 : index
    %c0_25 = arith.constant 0 : index
    %32 = vector.load %arg6[%c0_24, %c0_25] : memref<1x128xf32, #tpu.memory_space<vmem>>, vector<1x128xf32>
    %33 = vector.broadcast %32 : vector<1x128xf32> to vector<16x128xf32>
    %34 = arith.addf %31, %33 : vector<16x128xf32>
    %c0_26 = arith.constant 0 : index
    %c0_27 = arith.constant 0 : index
    %35 = vector.load %arg7[%c0_26, %c0_27] : memref<16x128xf32, #tpu.memory_space<vmem>>, vector<16x128xf32>
    tpu.vector_store %arg7[%c0_26, %c0_27], %34 {strides = array<i32>} : memref<16x128xf32, #tpu.memory_space<vmem>>, vector<16x128xf32>,
    return
  }
  func.func @transform_0(%arg0: i32) -> (i32, i32) {
    %c0_i32 = arith.constant 0 : i32
    %c0_i32_0 = arith.constant 0 : i32
    return %arg0, %c0_i32 : i32, i32
  }
  func.func @transform_1(%arg0: i32) -> (i32, i32) {
    %c0_i32 = arith.constant 0 : i32
    %c0_i32_0 = arith.constant 0 : i32
    %c0_i32_1 = arith.constant 0 : i32
    return %c0_i32, %c0_i32_0 : i32, i32
  }
  func.func @transform_2(%arg0: i32) -> (i32, i32, i32) {
    %c0_i32 = arith.constant 0 : i32
    %c0_i32_0 = arith.constant 0 : i32
    %c0_i32_1 = arith.constant 0 : i32
    %c0_i32_2 = arith.constant 0 : i32
    return %c0_i32, %c0_i32_0, %c0_i32_1 : i32, i32, i32
  }
  func.func @transform_3(%arg0: i32) -> (i32, i32) {
    %c0_i32 = arith.constant 0 : i32
    %c0_i32_0 = arith.constant 0 : i32
    %c0_i32_1 = arith.constant 0 : i32
    return %c0_i32, %c0_i32_0 : i32, i32
  }
  func.func @transform_4(%arg0: i32) -> (i32, i32, i32) {
    %c0_i32 = arith.constant 0 : i32
    %c0_i32_0 = arith.constant 0 : i32
    %c0_i32_1 = arith.constant 0 : i32
    %c0_i32_2 = arith.constant 0 : i32
    return %c0_i32, %c0_i32_0, %c0_i32_1 : i32, i32, i32
  }
  func.func @transform_5(%arg0: i32) -> (i32, i32) {
    %c0_i32 = arith.constant 0 : i32
    %c0_i32_0 = arith.constant 0 : i32
    %c0_i32_1 = arith.constant 0 : i32
    return %c0_i32, %c0_i32_0 : i32, i32
  }
  func.func @transform_6(%arg0: i32) -> (i32, i32) {
    %c0_i32 = arith.constant 0 : i32
    %c0_i32_0 = arith.constant 0 : i32
    return %arg0, %c0_i32 : i32, i32
  }
}

</mosaic_0001>

<llo_original>
// kernel: tpu_custom_call.1
$region0: #{tpu_custom_call.1}
  #allocation0 [shape = 'u32[]', space=smem, size = 0x4, offset = 0x4, fixed_abs, tag = 'smem constant byte address 0x4 - core index']
  #allocation1 [shape = 'u32[72,128]{1,0:T(1,128)}', space=vmem, size = 0x9000, scoped, tag = 'internal scratch']
  %s0 = inlined_call_operand.hbm [shape: bf16[16,128], index: 0, kind: input, shape index: {}]
  %s1 = inlined_call_operand.hbm [shape: bf16[128,128], index: 1, kind: input, shape index: {}]
  %s2 = inlined_call_operand.hbm [shape: bf16[2,128,128], index: 2, kind: input, shape index: {}]
  %s3 = inlined_call_operand.hbm [shape: bf16[128,128], index: 3, kind: input, shape index: {}]
  %s4 = inlined_call_operand.vmem [shape: f32[3,1,128], index: 4, kind: input, shape index: {}]
  %s5 = inlined_call_operand.vmem [shape: f32[1,128], index: 5, kind: input, shape index: {}]
  %s6 = inlined_call_operand.hbm [shape: f32[16,128], index: 6, kind: output, shape index: {}]
  %s7 = sld [smem:[#allocation0]]
  $region50: #{tpu_custom_call.1} parent=0
    _
  %s9 = ssub.s32 1, %s7
  %s10 = scalar_select 0, %s9, %s7
  $region1: #{tpu_custom_call.1} parent=0
    #allocation2 [shape = 'u8[4096]{0}', space=vmem, size = 0x1000, scoped, tag = 'input window, operand 0, single buffered']
    #allocation3 [shape = 's32[1]{0}', space=sflag, size = 0x4, scoped, tag = 'scoped memory for tpu_custom_call.1']
    #allocation4 [shape = 's32[1]{0}', space=sflag, size = 0x4, scoped, tag = 'scoped memory for tpu_custom_call.1']
    #allocation5 [shape = 'u8[32768]{0}', space=vmem, size = 0x8000, scoped, tag = 'input window, operand 1, single buffered']
    #allocation6 [shape = 's32[1]{0}', space=sflag, size = 0x4, scoped, tag = 'scoped memory for tpu_custom_call.1']
    #allocation7 [shape = 'u8[65536]{0}', space=vmem, size = 0x10000, scoped, tag = 'input window, operand 2, single buffered']
    #allocation8 [shape = 'u8[32768]{0}', space=vmem, size = 0x8000, scoped, tag = 'input window, operand 3, single buffered']
    #allocation9 [shape = 's32[1]{0}', space=sflag, size = 0x4, scoped, tag = 'scoped memory for tpu_custom_call.1']
    #allocation10 [shape = 'u8[8192]{0}', space=vmem, size = 0x2000, scoped, tag = 'output window, operand 0, single buffered']
    %11 = vsyncpa [#allocation3], 0
    %12 = vsyncpa [#allocation6], 0
    %13 = vsyncpa [#allocation9], 0
    %14 = vsyncpa [#allocation4], 0
    // Predicated region
    $region2: #{tpu_custom_call.1} parent=1 // pred_check
      _
    $region3: #{tpu_custom_call.1} parent=1 // pred_check_branch
      %16 = sbr.rel (0) target = $region5
    $region4: #{tpu_custom_call.1} parent=1 // pred_region
      %18 = vsyncadd [#allocation3], 0
      %s19 = sshll.u32 %s0, 4
      %s20 = int_to_ptr.hbm [resolvable:$true] %s19
      %s21 = sshll.u32 [#allocation2], 4
      %s22 = int_to_ptr.vmem [resolvable:$true] %s21
      %27 = dma.hbm_to_vmem [thread:$0]  %s20, 128, %s22, [#allocation3], 64, 64, 4
    $region5: #{tpu_custom_call.1} parent=1 // pred_fallthru
      _
    // Predicated region
    $region6: #{tpu_custom_call.1} parent=1 // pred_check
      _
    $region7: #{tpu_custom_call.1} parent=1 // pred_check_branch
      %29 = sbr.rel (0) target = $region9
    $region8: #{tpu_custom_call.1} parent=1 // pred_region
      %31 = vsyncadd [#allocation6], 0
      %s32 = sshll.u32 %s1, 4
      %s33 = int_to_ptr.hbm [resolvable:$true] %s32
      %s34 = sshll.u32 [#allocation5], 4
      %s35 = int_to_ptr.vmem [resolvable:$true] %s34
      %40 = dma.hbm_to_vmem [thread:$0]  %s33, 1024, %s35, [#allocation6], 64, 64, 4
    $region9: #{tpu_custom_call.1} parent=1 // pred_fallthru
      _
    // Predicated region
    $region10: #{tpu_custom_call.1} parent=1 // pred_check
      _
    $region11: #{tpu_custom_call.1} parent=1 // pred_check_branch
      %42 = sbr.rel (0) target = $region13
    $region12: #{tpu_custom_call.1} parent=1 // pred_region
      %44 = vsyncadd [#allocation6], 0
      %s45 = sshll.u32 %s2, 4
      %s46 = int_to_ptr.hbm [resolvable:$true] %s45
      %s47 = sshll.u32 [#allocation7], 4
      %s48 = int_to_ptr.vmem [resolvable:$true] %s47
      %53 = dma.hbm_to_vmem [thread:$0]  %s46, 2048, %s48, [#allocation6], 64, 64, 4
    $region13: #{tpu_custom_call.1} parent=1 // pred_fallthru
      _
    // Predicated region
    $region14: #{tpu_custom_call.1} parent=1 // pred_check
      _
    $region15: #{tpu_custom_call.1} parent=1 // pred_check_branch
      %55 = sbr.rel (0) target = $region17
    $region16: #{tpu_custom_call.1} parent=1 // pred_region
      %57 = vsyncadd [#allocation9], 0
      %s58 = sshll.u32 %s3, 4
      %s59 = int_to_ptr.hbm [resolvable:$true] %s58
      %s60 = sshll.u32 [#allocation8], 4
      %s61 = int_to_ptr.vmem [resolvable:$true] %s60
      %66 = dma.hbm_to_vmem [thread:$0]  %s59, 1024, %s61, [#allocation9], 64, 64, 4
    $region17: #{tpu_custom_call.1} parent=1 // pred_fallthru
      _
    // Predicated region
    $region18: #{tpu_custom_call.1} parent=1 // pred_check
      _
    $region19: #{tpu_custom_call.1} parent=1 // pred_check_branch
      %68 = sbr.rel (0) target = $region21
    $region20: #{tpu_custom_call.1} parent=1 // pred_region
      _
    $region21: #{tpu_custom_call.1} parent=1 // pred_fallthru
      _
    // Predicated region
    $region22: #{tpu_custom_call.1} parent=1 // pred_check
      _
    $region23: #{tpu_custom_call.1} parent=1 // pred_check_branch
      %70 = sbr.rel (0) target = $region25
    $region24: #{tpu_custom_call.1} parent=1 // pred_region
      _
    $region25: #{tpu_custom_call.1} parent=1 // pred_fallthru
      _
    // Predicated region
    $region26: #{tpu_custom_call.1} parent=1 // pred_check
      _
    $region27: #{tpu_custom_call.1} parent=1 // pred_check_branch
      %72 = sbr.rel (0) target = $region29
    $region28: #{tpu_custom_call.1} parent=1 // pred_region
      %74 = dma.done [#allocation3], 128
    $region29: #{tpu_custom_call.1} parent=1 // pred_fallthru
      _
    // Predicated region
    $region30: #{tpu_custom_call.1} parent=1 // pred_check
      _
    $region31: #{tpu_custom_call.1} parent=1 // pred_check_branch
      %76 = sbr.rel (0) target = $region33
    $region32: #{tpu_custom_call.1} parent=1 // pred_region
      %78 = dma.done [#allocation6], 1024
    $region33: #{tpu_custom_call.1} parent=1 // pred_fallthru
      _
    // Predicated region
    $region34: #{tpu_custom_call.1} parent=1 // pred_check
      _
    $region35: #{tpu_custom_call.1} parent=1 // pred_check_branch
      %80 = sbr.rel (0) target = $region37
    $region36: #{tpu_custom_call.1} parent=1 // pred_region
      %82 = dma.done [#allocation6], 2048
    $region37: #{tpu_custom_call.1} parent=1 // pred_fallthru
      _
    // Predicated region
    $region38: #{tpu_custom_call.1} parent=1 // pred_check
      _
    $region39: #{tpu_custom_call.1} parent=1 // pred_check_branch
      %84 = sbr.rel (0) target = $region41
    $region40: #{tpu_custom_call.1} parent=1 // pred_region
      %86 = dma.done [#allocation9], 1024
    $region41: #{tpu_custom_call.1} parent=1 // pred_fallthru
      _
    %v87 = vld [vmem:[#allocation2] sm:$0xf]
    %v88 = vld [vmem:[#allocation2 + $0x4] sm:$0xf]
    %v89 = vld [vmem:[#allocation5] sm:$0xf]
    %v90 = vld [vmem:[#allocation5 + $0x4] sm:$0xf]
    %v91 = vld [vmem:[#allocation5 + $0x8] sm:$0xf]
    %v92 = vld [vmem:[#allocation5 + $0xc] sm:$0xf]
    %v93 = vld [vmem:[#allocation5 + $0x10] sm:$0xf]
    %v94 = vld [vmem:[#allocation5 + $0x14] sm:$0xf]
    %v95 = vld [vmem:[#allocation5 + $0x18] sm:$0xf]
    %v96 = vld [vmem:[#allocation5 + $0x1c] sm:$0xf]
    %v97 = vld [vmem:[#allocation5 + $0x20] sm:$0xf]
    %v98 = vld [vmem:[#allocation5 + $0x24] sm:$0xf]
    %v99 = vld [vmem:[#allocation5 + $0x28] sm:$0xf]
    %v100 = vld [vmem:[#allocation5 + $0x2c] sm:$0xf]
    %v101 = vld [vmem:[#allocation5 + $0x30] sm:$0xf]
    %v102 = vld [vmem:[#allocation5 + $0x34] sm:$0xf]
    %v103 = vld [vmem:[#allocation5 + $0x38] sm:$0xf]
    %v104 = vld [vmem:[#allocation5 + $0x3c] sm:$0xf]
    %v105 = vld [vmem:[%s4] sm:$0x1]
    %v107 = vperm.slane %v105, 0
    %v111 = vunpack.c.l.b16 %v87
    %v112 = vunpack.c.l.b16 %v88
    %v113 = vpack.c.b16 %v112, %v111
    %v131 = vunpack.c.l.b16 %v89
    %v132 = vunpack.c.l.b16 %v90
    %v133 = vunpack.c.l.b16 %v91
    %v134 = vunpack.c.l.b16 %v92
    %v135 = vunpack.c.l.b16 %v93
    %v136 = vunpack.c.l.b16 %v94
    %v137 = vunpack.c.l.b16 %v95
    %v138 = vunpack.c.l.b16 %v96
    %v139 = vunpack.c.l.b16 %v97
    %v140 = vunpack.c.l.b16 %v98
    %v141 = vunpack.c.l.b16 %v99
    %v142 = vunpack.c.l.b16 %v100
    %v143 = vunpack.c.l.b16 %v101
    %v144 = vunpack.c.l.b16 %v102
    %v145 = vunpack.c.l.b16 %v103
    %v146 = vunpack.c.l.b16 %v104
    %v147 = vpack.c.b16 %v132, %v131
    %v148 = vpack.c.b16 %v134, %v133
    %v149 = vpack.c.b16 %v136, %v135
    %v150 = vpack.c.b16 %v138, %v137
    %v151 = vpack.c.b16 %v140, %v139
    %v152 = vpack.c.b16 %v142, %v141
    %v153 = vpack.c.b16 %v144, %v143
    %v154 = vpack.c.b16 %v146, %v145
    %163 = vmatpush.bf16.msra.mxu0 %v154
    %164 = vmatpush.bf16.msra.mxu0 %v153
    %165 = vmatpush.bf16.msra.mxu0 %v152
    %166 = vmatpush.bf16.msra.mxu0 %v151
    %167 = vmatpush.bf16.msra.mxu0 %v150
    %168 = vmatpush.bf16.msra.mxu0 %v149
    %169 = vmatpush.bf16.msra.mxu0 %v148
    %170 = vmatpush.bf16.msra.mxu0 %v147
    %171 = vmatmul.bf16.gmra.mxu0 %v113
    %v172 = vpop.f32.mrf.mxu0
    %v173 = vadd.f32 %v107, %v172
    %v174 = vpop.f32.mrf.mxu0
    %v175 = vadd.f32 %v107, %v174
    %176 = vdwg.mxu0
    %v177 = vmax.f32 %v173, 0.0
    %v178 = vmax.f32 %v175, 0.0
    %v179 = vpack.c.bf16 %v178, %v177
    %v180 = vld [vmem:[#allocation7] sm:$0xf]
    %v181 = vld [vmem:[#allocation7 + $0x4] sm:$0xf]
    %v182 = vld [vmem:[#allocation7 + $0x8] sm:$0xf]
    %v183 = vld [vmem:[#allocation7 + $0xc] sm:$0xf]
    %v184 = vld [vmem:[#allocation7 + $0x10] sm:$0xf]
    %v185 = vld [vmem:[#allocation7 + $0x14] sm:$0xf]
    %v186 = vld [vmem:[#allocation7 + $0x18] sm:$0xf]
    %v187 = vld [vmem:[#allocation7 + $0x1c] sm:$0xf]
    %v188 = vld [vmem:[#allocation7 + $0x20] sm:$0xf]
    %v189 = vld [vmem:[#allocation7 + $0x24] sm:$0xf]
    %v190 = vld [vmem:[#allocation7 + $0x28] sm:$0xf]
    %v191 = vld [vmem:[#allocation7 + $0x2c] sm:$0xf]
    %v192 = vld [vmem:[#allocation7 + $0x30] sm:$0xf]
    %v193 = vld [vmem:[#allocation7 + $0x34] sm:$0xf]
    %v194 = vld [vmem:[#allocation7 + $0x38] sm:$0xf]
    %v195 = vld [vmem:[#allocation7 + $0x3c] sm:$0xf]
    %s196 = scalar_lea.vmem %s4, 1
    %v197 = vld [vmem:[%s196] sm:$0x1]
    %v199 = vperm.slane %v197, 0
    %v217 = vunpack.c.l.b16 %v180
    %v218 = vunpack.c.l.b16 %v181
    %v219 = vunpack.c.l.b16 %v182
    %v220 = vunpack.c.l.b16 %v183
    %v221 = vunpack.c.l.b16 %v184
    %v222 = vunpack.c.l.b16 %v185
    %v223 = vunpack.c.l.b16 %v186
    %v224 = vunpack.c.l.b16 %v187
    %v225 = vunpack.c.l.b16 %v188
    %v226 = vunpack.c.l.b16 %v189
    %v227 = vunpack.c.l.b16 %v190
    %v228 = vunpack.c.l.b16 %v191
    %v229 = vunpack.c.l.b16 %v192
    %v230 = vunpack.c.l.b16 %v193
    %v231 = vunpack.c.l.b16 %v194
    %v232 = vunpack.c.l.b16 %v195
    %v233 = vpack.c.b16 %v218, %v217
    %v234 = vpack.c.b16 %v220, %v219
    %v235 = vpack.c.b16 %v222, %v221
    %v236 = vpack.c.b16 %v224, %v223
    %v237 = vpack.c.b16 %v226, %v225
    %v238 = vpack.c.b16 %v228, %v227
    %v239 = vpack.c.b16 %v230, %v229
    %v240 = vpack.c.b16 %v232, %v231
    %249 = vmatpush.bf16.msra.mxu0 %v240
    %250 = vmatpush.bf16.msra.mxu0 %v239
    %251 = vmatpush.bf16.msra.mxu0 %v238
    %252 = vmatpush.bf16.msra.mxu0 %v237
    %253 = vmatpush.bf16.msra.mxu0 %v236
    %254 = vmatpush.bf16.msra.mxu0 %v235
    %255 = vmatpush.bf16.msra.mxu0 %v234
    %256 = vmatpush.bf16.msra.mxu0 %v233
    %257 = vmatmul.bf16.gmra.mxu0 %v179
    %v258 = vpop.f32.mrf.mxu0
    %v259 = vadd.f32 %v199, %v258
    %v260 = vpop.f32.mrf.mxu0
    %v261 = vadd.f32 %v199, %v260
    %262 = vdwg.mxu0
    %v263 = vmax.f32 %v259, 0.0
    %v264 = vmax.f32 %v261, 0.0
    %v265 = vpack.c.bf16 %v264, %v263
    %s266 = scalar_lea.vmem [#allocation7], 64
    %v267 = vld [vmem:[%s266] sm:$0xf]
    %v268 = vld [vmem:[%s266 + $0x4] sm:$0xf]
    %v269 = vld [vmem:[%s266 + $0x8] sm:$0xf]
    %v270 = vld [vmem:[%s266 + $0xc] sm:$0xf]
    %v271 = vld [vmem:[%s266 + $0x10] sm:$0xf]
    %v272 = vld [vmem:[%s266 + $0x14] sm:$0xf]
    %v273 = vld [vmem:[%s266 + $0x18] sm:$0xf]
    %v274 = vld [vmem:[%s266 + $0x1c] sm:$0xf]
    %v275 = vld [vmem:[%s266 + $0x20] sm:$0xf]
    %v276 = vld [vmem:[%s266 + $0x24] sm:$0xf]
    %v277 = vld [vmem:[%s266 + $0x28] sm:$0xf]
    %v278 = vld [vmem:[%s266 + $0x2c] sm:$0xf]
    %v279 = vld [vmem:[%s266 + $0x30] sm:$0xf]
    %v280 = vld [vmem:[%s266 + $0x34] sm:$0xf]
    %v281 = vld [vmem:[%s266 + $0x38] sm:$0xf]
    %v282 = vld [vmem:[%s266 + $0x3c] sm:$0xf]
    %s283 = scalar_lea.vmem %s4, 2
    %v284 = vld [vmem:[%s283] sm:$0x1]
    %v286 = vperm.slane %v284, 0
    %v304 = vunpack.c.l.b16 %v267
    %v305 = vunpack.c.l.b16 %v268
    %v306 = vunpack.c.l.b16 %v269
    %v307 = vunpack.c.l.b16 %v270
    %v308 = vunpack.c.l.b16 %v271
    %v309 = vunpack.c.l.b16 %v272
    %v310 = vunpack.c.l.b16 %v273
    %v311 = vunpack.c.l.b16 %v274
    %v312 = vunpack.c.l.b16 %v275
    %v313 = vunpack.c.l.b16 %v276
    %v314 = vunpack.c.l.b16 %v277
    %v315 = vunpack.c.l.b16 %v278
    %v316 = vunpack.c.l.b16 %v279
    %v317 = vunpack.c.l.b16 %v280
    %v318 = vunpack.c.l.b16 %v281
    %v319 = vunpack.c.l.b16 %v282
    %v320 = vpack.c.b16 %v305, %v304
    %v321 = vpack.c.b16 %v307, %v306
    %v322 = vpack.c.b16 %v309, %v308
    %v323 = vpack.c.b16 %v311, %v310
    %v324 = vpack.c.b16 %v313, %v312
    %v325 = vpack.c.b16 %v315, %v314
    %v326 = vpack.c.b16 %v317, %v316
    %v327 = vpack.c.b16 %v319, %v318
    %336 = vmatpush.bf16.msra.mxu0 %v327
    %337 = vmatpush.bf16.msra.mxu0 %v326
    %338 = vmatpush.bf16.msra.mxu0 %v325
    %339 = vmatpush.bf16.msra.mxu0 %v324
    %340 = vmatpush.bf16.msra.mxu0 %v323
    %341 = vmatpush.bf16.msra.mxu0 %v322
    %342 = vmatpush.bf16.msra.mxu0 %v321
    %343 = vmatpush.bf16.msra.mxu0 %v320
    %344 = vmatmul.bf16.gmra.mxu0 %v265
    %v345 = vpop.f32.mrf.mxu0
    %v346 = vadd.f32 %v286, %v345
    %v347 = vpop.f32.mrf.mxu0
    %v348 = vadd.f32 %v286, %v347
    %349 = vdwg.mxu0
    %v350 = vmax.f32 %v346, 0.0
    %v351 = vmax.f32 %v348, 0.0
    %v352 = vpack.c.bf16 %v351, %v350
    %v353 = vld [vmem:[#allocation8] sm:$0xf]
    %v354 = vld [vmem:[#allocation8 + $0x4] sm:$0xf]
    %v355 = vld [vmem:[#allocation8 + $0x8] sm:$0xf]
    %v356 = vld [vmem:[#allocation8 + $0xc] sm:$0xf]
    %v357 = vld [vmem:[#allocation8 + $0x10] sm:$0xf]
    %v358 = vld [vmem:[#allocation8 + $0x14] sm:$0xf]
    %v359 = vld [vmem:[#allocation8 + $0x18] sm:$0xf]
    %v360 = vld [vmem:[#allocation8 + $0x1c] sm:$0xf]
    %v361 = vld [vmem:[#allocation8 + $0x20] sm:$0xf]
    %v362 = vld [vmem:[#allocation8 + $0x24] sm:$0xf]
    %v363 = vld [vmem:[#allocation8 + $0x28] sm:$0xf]
    %v364 = vld [vmem:[#allocation8 + $0x2c] sm:$0xf]
    %v365 = vld [vmem:[#allocation8 + $0x30] sm:$0xf]
    %v366 = vld [vmem:[#allocation8 + $0x34] sm:$0xf]
    %v367 = vld [vmem:[#allocation8 + $0x38] sm:$0xf]
    %v368 = vld [vmem:[#allocation8 + $0x3c] sm:$0xf]
    %v369 = vld [vmem:[%s5] sm:$0x1]
    %v371 = vperm.slane %v369, 0
    %v389 = vunpack.c.l.b16 %v353
    %v390 = vunpack.c.l.b16 %v354
    %v391 = vunpack.c.l.b16 %v355
    %v392 = vunpack.c.l.b16 %v356
    %v393 = vunpack.c.l.b16 %v357
    %v394 = vunpack.c.l.b16 %v358
    %v395 = vunpack.c.l.b16 %v359
    %v396 = vunpack.c.l.b16 %v360
    %v397 = vunpack.c.l.b16 %v361
    %v398 = vunpack.c.l.b16 %v362
    %v399 = vunpack.c.l.b16 %v363
    %v400 = vunpack.c.l.b16 %v364
    %v401 = vunpack.c.l.b16 %v365
    %v402 = vunpack.c.l.b16 %v366
    %v403 = vunpack.c.l.b16 %v367
    %v404 = vunpack.c.l.b16 %v368
    %v405 = vpack.c.b16 %v390, %v389
    %v406 = vpack.c.b16 %v392, %v391
    %v407 = vpack.c.b16 %v394, %v393
    %v408 = vpack.c.b16 %v396, %v395
    %v409 = vpack.c.b16 %v398, %v397
    %v410 = vpack.c.b16 %v400, %v399
    %v411 = vpack.c.b16 %v402, %v401
    %v412 = vpack.c.b16 %v404, %v403
    %421 = vmatpush.bf16.msra.mxu0 %v412
    %422 = vmatpush.bf16.msra.mxu0 %v411
    %423 = vmatpush.bf16.msra.mxu0 %v410
    %424 = vmatpush.bf16.msra.mxu0 %v409
    %425 = vmatpush.bf16.msra.mxu0 %v408
    %426 = vmatpush.bf16.msra.mxu0 %v407
    %427 = vmatpush.bf16.msra.mxu0 %v406
    %428 = vmatpush.bf16.msra.mxu0 %v405
    %429 = vmatmul.bf16.gmra.mxu0 %v352
    %v430 = vpop.f32.mrf.mxu0
    %v431 = vadd.f32 %v371, %v430
    %v432 = vpop.f32.mrf.mxu0
    %v433 = vadd.f32 %v371, %v432
    %434 = vdwg.mxu0
    %435 = vst [vmem:[#allocation10] sm:$0xff] %v431
    %436 = vst [vmem:[#allocation10 + $0x8] sm:$0xff] %v433
    // Predicated region
    $region42: #{tpu_custom_call.1} parent=1 // pred_check
      _
    $region43: #{tpu_custom_call.1} parent=1 // pred_check_branch
      %438 = sbr.rel (0) target = $region45
    $region44: #{tpu_custom_call.1} parent=1 // pred_region
      %440 = vsyncadd [#allocation4], 0
      %s441 = sshll.u32 [#allocation10], 4
      %s442 = int_to_ptr.vmem [resolvable:$true] %s441
      %s443 = sshll.u32 %s6, 4
      %s444 = int_to_ptr.hbm [resolvable:$true] %s443
      %449 = dma.vmem_to_hbm [thread:$0]  %s442, 256, %s444, [#allocation4], 128, 128, 8
    $region45: #{tpu_custom_call.1} parent=1 // pred_fallthru
      _
    // Predicated region
    $region46: #{tpu_custom_call.1} parent=1 // pred_check
      _
    $region47: #{tpu_custom_call.1} parent=1 // pred_check_branch
      %451 = sbr.rel (0) target = $region49
    $region48: #{tpu_custom_call.1} parent=1 // pred_region
      %453 = dma.done [#allocation4], 256
    $region49: #{tpu_custom_call.1} parent=1 // pred_fallthru
      _
    %454 = vsyncpa [#allocation3], 1
    %455 = vsyncpa [#allocation6], 1
    %456 = vsyncpa [#allocation9], 1
    %457 = vsyncpa [#allocation4], 1

// kernel: tpu_custom_call.1
$region0: #{tpu_custom_call.1}
  #allocation0 [shape = 'u32[]', space=smem, size = 0x4, offset = 0x4, fixed_abs, tag = 'smem constant byte address 0x4 - core index']
  #allocation1 [shape = 'u32[72,128]{1,0:T(1,128)}', space=vmem, size = 0x9000, scoped, tag = 'internal scratch']
  %s0 = inlined_call_operand.hbm [shape: bf16[16,128], index: 0, kind: input, shape index: {}]
  %s1 = inlined_call_operand.hbm [shape: bf16[128,128], index: 1, kind: input, shape index: {}]
  %s2 = inlined_call_operand.hbm [shape: bf16[2,128,128], index: 2, kind: input, shape index: {}]
  %s3 = inlined_call_operand.hbm [shape: bf16[128,128], index: 3, kind: input, shape index: {}]
  %s4 = inlined_call_operand.vmem [shape: f32[3,1,128], index: 4, kind: input, shape index: {}]
  %s5 = inlined_call_operand.vmem [shape: f32[1,128], index: 5, kind: input, shape index: {}]
  %s6 = inlined_call_operand.hbm [shape: f32[16,128], index: 6, kind: output, shape index: {}]
  %s7 = sld [smem:[#allocation0]]
  $region50: #{tpu_custom_call.1} parent=0
    _
  %s9 = ssub.s32 1, %s7
  %s10 = scalar_select 0, %s9, %s7
  $region1: #{tpu_custom_call.1} parent=0
    #allocation2 [shape = 'u8[4096]{0}', space=vmem, size = 0x1000, scoped, tag = 'input window, operand 0, single buffered']
    #allocation3 [shape = 's32[1]{0}', space=sflag, size = 0x4, scoped, tag = 'scoped memory for tpu_custom_call.1']
    #allocation4 [shape = 's32[1]{0}', space=sflag, size = 0x4, scoped, tag = 'scoped memory for tpu_custom_call.1']
    #allocation5 [shape = 'u8[32768]{0}', space=vmem, size = 0x8000, scoped, tag = 'input window, operand 1, single buffered']
    #allocation6 [shape = 's32[1]{0}', space=sflag, size = 0x4, scoped, tag = 'scoped memory for tpu_custom_call.1']
    #allocation7 [shape = 'u8[65536]{0}', space=vmem, size = 0x10000, scoped, tag = 'input window, operand 2, single buffered']
    #allocation8 [shape = 'u8[32768]{0}', space=vmem, size = 0x8000, scoped, tag = 'input window, operand 3, single buffered']
    #allocation9 [shape = 's32[1]{0}', space=sflag, size = 0x4, scoped, tag = 'scoped memory for tpu_custom_call.1']
    #allocation10 [shape = 'u8[8192]{0}', space=vmem, size = 0x2000, scoped, tag = 'output window, operand 0, single buffered']
    %11 = vsyncpa [#allocation3], 0
    %12 = vsyncpa [#allocation6], 0
    %13 = vsyncpa [#allocation9], 0
    %14 = vsyncpa [#allocation4], 0
    // Predicated region
    $region2: #{tpu_custom_call.1} parent=1 // pred_check
      _
    $region3: #{tpu_custom_call.1} parent=1 // pred_check_branch
      %16 = sbr.rel (0) target = $region5
    $region4: #{tpu_custom_call.1} parent=1 // pred_region
      %18 = vsyncadd [#allocation3], 0
      %s19 = sshll.u32 %s0, 4
      %s20 = int_to_ptr.hbm [resolvable:$true] %s19
      %s21 = sshll.u32 [#allocation2], 4
      %s22 = int_to_ptr.vmem [resolvable:$true] %s21
      %27 = dma.hbm_to_vmem [thread:$0]  %s20, 128, %s22, [#allocation3], 64, 64, 4
    $region5: #{tpu_custom_call.1} parent=1 // pred_fallthru
      _
    // Predicated region
    $region6: #{tpu_custom_call.1} parent=1 // pred_check
      _
    $region7: #{tpu_custom_call.1} parent=1 // pred_check_branch
      %29 = sbr.rel (0) target = $region9
    $region8: #{tpu_custom_call.1} parent=1 // pred_region
      %31 = vsyncadd [#allocation6], 0
      %s32 = sshll.u32 %s1, 4
      %s33 = int_to_ptr.hbm [resolvable:$true] %s32
      %s34 = sshll.u32 [#allocation5], 4
      %s35 = int_to_ptr.vmem [resolvable:$true] %s34
      %40 = dma.hbm_to_vmem [thread:$0]  %s33, 1024, %s35, [#allocation6], 64, 64, 4
    $region9: #{tpu_custom_call.1} parent=1 // pred_fallthru
      _
    // Predicated region
    $region10: #{tpu_custom_call.1} parent=1 // pred_check
      _
    $region11: #{tpu_custom_call.1} parent=1 // pred_check_branch
      %42 = sbr.rel (0) target = $region13
    $region12: #{tpu_custom_call.1} parent=1 // pred_region
      %44 = vsyncadd [#allocation6], 0
      %s45 = sshll.u32 %s2, 4
      %s46 = int_to_ptr.hbm [resolvable:$true] %s45
      %s47 = sshll.u32 [#allocation7], 4
      %s48 = int_to_ptr.vmem [resolvable:$true] %s47
      %53 = dma.hbm_to_vmem [thread:$0]  %s46, 2048, %s48, [#allocation6], 64, 64, 4
    $region13: #{tpu_custom_call.1} parent=1 // pred_fallthru
      _
    // Predicated region
    $region14: #{tpu_custom_call.1} parent=1 // pred_check
      _
    $region15: #{tpu_custom_call.1} parent=1 // pred_check_branch
      %55 = sbr.rel (0) target = $region17
    $region16: #{tpu_custom_call.1} parent=1 // pred_region
      %57 = vsyncadd [#allocation9], 0
      %s58 = sshll.u32 %s3, 4
      %s59 = int_to_ptr.hbm [resolvable:$true] %s58
      %s60 = sshll.u32 [#allocation8], 4
      %s61 = int_to_ptr.vmem [resolvable:$true] %s60
      %66 = dma.hbm_to_vmem [thread:$0]  %s59, 1024, %s61, [#allocation9], 64, 64, 4
    $region17: #{tpu_custom_call.1} parent=1 // pred_fallthru
      _
    // Predicated region
    $region18: #{tpu_custom_call.1} parent=1 // pred_check
      _
    $region19: #{tpu_custom_call.1} parent=1 // pred_check_branch
      %68 = sbr.rel (0) target = $region21
    $region20: #{tpu_custom_call.1} parent=1 // pred_region
      _
    $region21: #{tpu_custom_call.1} parent=1 // pred_fallthru
      _
    // Predicated region
    $region22: #{tpu_custom_call.1} parent=1 // pred_check
      _
    $region23: #{tpu_custom_call.1} parent=1 // pred_check_branch
      %70 = sbr.rel (0) target = $region25
    $region24: #{tpu_custom_call.1} parent=1 // pred_region
      _
    $region25: #{tpu_custom_call.1} parent=1 // pred_fallthru
      _
    // Predicated region
    $region26: #{tpu_custom_call.1} parent=1 // pred_check
      _
    $region27: #{tpu_custom_call.1} parent=1 // pred_check_branch
      %72 = sbr.rel (0) target = $region29
    $region28: #{tpu_custom_call.1} parent=1 // pred_region
      %74 = dma.done [#allocation3], 128
    $region29: #{tpu_custom_call.1} parent=1 // pred_fallthru
      _
    // Predicated region
    $region30: #{tpu_custom_call.1} parent=1 // pred_check
      _
    $region31: #{tpu_custom_call.1} parent=1 // pred_check_branch
      %76 = sbr.rel (0) target = $region33
    $region32: #{tpu_custom_call.1} parent=1 // pred_region
      %78 = dma.done [#allocation6], 1024
    $region33: #{tpu_custom_call.1} parent=1 // pred_fallthru
      _
    // Predicated region
    $region34: #{tpu_custom_call.1} parent=1 // pred_check
      _
    $region35: #{tpu_custom_call.1} parent=1 // pred_check_branch
      %80 = sbr.rel (0) target = $region37
    $region36: #{tpu_custom_call.1} parent=1 // pred_region
      %82 = dma.done [#allocation6], 2048
    $region37: #{tpu_custom_call.1} parent=1 // pred_fallthru
      _
    // Predicated region
    $region38: #{tpu_custom_call.1} parent=1 // pred_check
      _
    $region39: #{tpu_custom_call.1} parent=1 // pred_check_branch
      %84 = sbr.rel (0) target = $region41
    $region40: #{tpu_custom_call.1} parent=1 // pred_region
      %86 = dma.done [#allocation9], 1024
    $region41: #{tpu_custom_call.1} parent=1 // pred_fallthru
      _
    %v87 = vld [vmem:[#allocation2] sm:$0xf]
    %v88 = vld [vmem:[#allocation2 + $0x4] sm:$0xf]
    %v89 = vld [vmem:[#allocation5] sm:$0xf]
    %v90 = vld [vmem:[#allocation5 + $0x4] sm:$0xf]
    %v91 = vld [vmem:[#allocation5 + $0x8] sm:$0xf]
    %v92 = vld [vmem:[#allocation5 + $0xc] sm:$0xf]
    %v93 = vld [vmem:[#allocation5 + $0x10] sm:$0xf]
    %v94 = vld [vmem:[#allocation5 + $0x14] sm:$0xf]
    %v95 = vld [vmem:[#allocation5 + $0x18] sm:$0xf]
    %v96 = vld [vmem:[#allocation5 + $0x1c] sm:$0xf]
    %v97 = vld [vmem:[#allocation5 + $0x20] sm:$0xf]
    %v98 = vld [vmem:[#allocation5 + $0x24] sm:$0xf]
    %v99 = vld [vmem:[#allocation5 + $0x28] sm:$0xf]
    %v100 = vld [vmem:[#allocation5 + $0x2c] sm:$0xf]
    %v101 = vld [vmem:[#allocation5 + $0x30] sm:$0xf]
    %v102 = vld [vmem:[#allocation5 + $0x34] sm:$0xf]
    %v103 = vld [vmem:[#allocation5 + $0x38] sm:$0xf]
    %v104 = vld [vmem:[#allocation5 + $0x3c] sm:$0xf]
    %v105 = vld [vmem:[%s4] sm:$0x1]
    %v107 = vperm.slane %v105, 0
    %v111 = vunpack.c.l.b16 %v87
    %v112 = vunpack.c.l.b16 %v88
    %v113 = vpack.c.b16 %v112, %v111
    %v131 = vunpack.c.l.b16 %v89
    %v132 = vunpack.c.l.b16 %v90
    %v133 = vunpack.c.l.b16 %v91
    %v134 = vunpack.c.l.b16 %v92
    %v135 = vunpack.c.l.b16 %v93
    %v136 = vunpack.c.l.b16 %v94
    %v137 = vunpack.c.l.b16 %v95
    %v138 = vunpack.c.l.b16 %v96
    %v139 = vunpack.c.l.b16 %v97
    %v140 = vunpack.c.l.b16 %v98
    %v141 = vunpack.c.l.b16 %v99
    %v142 = vunpack.c.l.b16 %v100
    %v143 = vunpack.c.l.b16 %v101
    %v144 = vunpack.c.l.b16 %v102
    %v145 = vunpack.c.l.b16 %v103
    %v146 = vunpack.c.l.b16 %v104
    %v147 = vpack.c.b16 %v132, %v131
    %v148 = vpack.c.b16 %v134, %v133
    %v149 = vpack.c.b16 %v136, %v135
    %v150 = vpack.c.b16 %v138, %v137
    %v151 = vpack.c.b16 %v140, %v139
    %v152 = vpack.c.b16 %v142, %v141
    %v153 = vpack.c.b16 %v144, %v143
    %v154 = vpack.c.b16 %v146, %v145
    %163 = vmatpush.bf16.msra.mxu0 %v154
    %164 = vmatpush.bf16.msra.mxu0 %v153
    %165 = vmatpush.bf16.msra.mxu0 %v152
    %166 = vmatpush.bf16.msra.mxu0 %v151
    %167 = vmatpush.bf16.msra.mxu0 %v150
    %168 = vmatpush.bf16.msra.mxu0 %v149
    %169 = vmatpush.bf16.msra.mxu0 %v148
    %170 = vmatpush.bf16.msra.mxu0 %v147
    %171 = vmatmul.bf16.gmra.mxu0 %v113
    %v172 = vpop.f32.mrf.mxu0
    %v173 = vadd.f32 %v107, %v172
    %v174 = vpop.f32.mrf.mxu0
    %v175 = vadd.f32 %v107, %v174
    %176 = vdwg.mxu0
    %v177 = vmax.f32 %v173, 0.0
    %v178 = vmax.f32 %v175, 0.0
    %v179 = vpack.c.bf16 %v178, %v177
    %v180 = vld [vmem:[#allocation7] sm:$0xf]
    %v181 = vld [vmem:[#allocation7 + $0x4] sm:$0xf]
    %v182 = vld [vmem:[#allocation7 + $0x8] sm:$0xf]
    %v183 = vld [vmem:[#allocation7 + $0xc] sm:$0xf]
    %v184 = vld [vmem:[#allocation7 + $0x10] sm:$0xf]
    %v185 = vld [vmem:[#allocation7 + $0x14] sm:$0xf]
    %v186 = vld [vmem:[#allocation7 + $0x18] sm:$0xf]
    %v187 = vld [vmem:[#allocation7 + $0x1c] sm:$0xf]
    %v188 = vld [vmem:[#allocation7 + $0x20] sm:$0xf]
    %v189 = vld [vmem:[#allocation7 + $0x24] sm:$0xf]
    %v190 = vld [vmem:[#allocation7 + $0x28] sm:$0xf]
    %v191 = vld [vmem:[#allocation7 + $0x2c] sm:$0xf]
    %v192 = vld [vmem:[#allocation7 + $0x30] sm:$0xf]
    %v193 = vld [vmem:[#allocation7 + $0x34] sm:$0xf]
    %v194 = vld [vmem:[#allocation7 + $0x38] sm:$0xf]
    %v195 = vld [vmem:[#allocation7 + $0x3c] sm:$0xf]
    %s196 = scalar_lea.vmem %s4, 1
    %v197 = vld [vmem:[%s196] sm:$0x1]
    %v199 = vperm.slane %v197, 0
    %v217 = vunpack.c.l.b16 %v180
    %v218 = vunpack.c.l.b16 %v181
    %v219 = vunpack.c.l.b16 %v182
    %v220 = vunpack.c.l.b16 %v183
    %v221 = vunpack.c.l.b16 %v184
    %v222 = vunpack.c.l.b16 %v185
    %v223 = vunpack.c.l.b16 %v186
    %v224 = vunpack.c.l.b16 %v187
    %v225 = vunpack.c.l.b16 %v188
    %v226 = vunpack.c.l.b16 %v189
    %v227 = vunpack.c.l.b16 %v190
    %v228 = vunpack.c.l.b16 %v191
    %v229 = vunpack.c.l.b16 %v192
    %v230 = vunpack.c.l.b16 %v193
    %v231 = vunpack.c.l.b16 %v194
    %v232 = vunpack.c.l.b16 %v195
    %v233 = vpack.c.b16 %v218, %v217
    %v234 = vpack.c.b16 %v220, %v219
    %v235 = vpack.c.b16 %v222, %v221
    %v236 = vpack.c.b16 %v224, %v223
    %v237 = vpack.c.b16 %v226, %v225
    %v238 = vpack.c.b16 %v228, %v227
    %v239 = vpack.c.b16 %v230, %v229
    %v240 = vpack.c.b16 %v232, %v231
    %249 = vmatpush.bf16.msra.mxu0 %v240
    %250 = vmatpush.bf16.msra.mxu0 %v239
    %251 = vmatpush.bf16.msra.mxu0 %v238
    %252 = vmatpush.bf16.msra.mxu0 %v237
    %253 = vmatpush.bf16.msra.mxu0 %v236
    %254 = vmatpush.bf16.msra.mxu0 %v235
    %255 = vmatpush.bf16.msra.mxu0 %v234
    %256 = vmatpush.bf16.msra.mxu0 %v233
    %257 = vmatmul.bf16.gmra.mxu0 %v179
    %v258 = vpop.f32.mrf.mxu0
    %v259 = vadd.f32 %v199, %v258
    %v260 = vpop.f32.mrf.mxu0
    %v261 = vadd.f32 %v199, %v260
    %262 = vdwg.mxu0
    %v263 = vmax.f32 %v259, 0.0
    %v264 = vmax.f32 %v261, 0.0
    %v265 = vpack.c.bf16 %v264, %v263
    %s266 = scalar_lea.vmem [#allocation7], 64
    %v267 = vld [vmem:[%s266] sm:$0xf]
    %v268 = vld [vmem:[%s266 + $0x4] sm:$0xf]
    %v269 = vld [vmem:[%s266 + $0x8] sm:$0xf]
    %v270 = vld [vmem:[%s266 + $0xc] sm:$0xf]
    %v271 = vld [vmem:[%s266 + $0x10] sm:$0xf]
    %v272 = vld [vmem:[%s266 + $0x14] sm:$0xf]
    %v273 = vld [vmem:[%s266 + $0x18] sm:$0xf]
    %v274 = vld [vmem:[%s266 + $0x1c] sm:$0xf]
    %v275 = vld [vmem:[%s266 + $0x20] sm:$0xf]
    %v276 = vld [vmem:[%s266 + $0x24] sm:$0xf]
    %v277 = vld [vmem:[%s266 + $0x28] sm:$0xf]
    %v278 = vld [vmem:[%s266 + $0x2c] sm:$0xf]
    %v279 = vld [vmem:[%s266 + $0x30] sm:$0xf]
    %v280 = vld [vmem:[%s266 + $0x34] sm:$0xf]
    %v281 = vld [vmem:[%s266 + $0x38] sm:$0xf]
    %v282 = vld [vmem:[%s266 + $0x3c] sm:$0xf]
    %s283 = scalar_lea.vmem %s4, 2
    %v284 = vld [vmem:[%s283] sm:$0x1]
    %v286 = vperm.slane %v284, 0
    %v304 = vunpack.c.l.b16 %v267
    %v305 = vunpack.c.l.b16 %v268
    %v306 = vunpack.c.l.b16 %v269
    %v307 = vunpack.c.l.b16 %v270
    %v308 = vunpack.c.l.b16 %v271
    %v309 = vunpack.c.l.b16 %v272
    %v310 = vunpack.c.l.b16 %v273
    %v311 = vunpack.c.l.b16 %v274
    %v312 = vunpack.c.l.b16 %v275
    %v313 = vunpack.c.l.b16 %v276
    %v314 = vunpack.c.l.b16 %v277
    %v315 = vunpack.c.l.b16 %v278
    %v316 = vunpack.c.l.b16 %v279
    %v317 = vunpack.c.l.b16 %v280
    %v318 = vunpack.c.l.b16 %v281
    %v319 = vunpack.c.l.b16 %v282
    %v320 = vpack.c.b16 %v305, %v304
    %v321 = vpack.c.b16 %v307, %v306
    %v322 = vpack.c.b16 %v309, %v308
    %v323 = vpack.c.b16 %v311, %v310
    %v324 = vpack.c.b16 %v313, %v312
    %v325 = vpack.c.b16 %v315, %v314
    %v326 = vpack.c.b16 %v317, %v316
    %v327 = vpack.c.b16 %v319, %v318
    %336 = vmatpush.bf16.msra.mxu0 %v327
    %337 = vmatpush.bf16.msra.mxu0 %v326
    %338 = vmatpush.bf16.msra.mxu0 %v325
    %339 = vmatpush.bf16.msra.mxu0 %v324
    %340 = vmatpush.bf16.msra.mxu0 %v323
    %341 = vmatpush.bf16.msra.mxu0 %v322
    %342 = vmatpush.bf16.msra.mxu0 %v321
    %343 = vmatpush.bf16.msra.mxu0 %v320
    %344 = vmatmul.bf16.gmra.mxu0 %v265
    %v345 = vpop.f32.mrf.mxu0
    %v346 = vadd.f32 %v286, %v345
    %v347 = vpop.f32.mrf.mxu0
    %v348 = vadd.f32 %v286, %v347
    %349 = vdwg.mxu0
    %v350 = vmax.f32 %v346, 0.0
    %v351 = vmax.f32 %v348, 0.0
    %v352 = vpack.c.bf16 %v351, %v350
    %v353 = vld [vmem:[#allocation8] sm:$0xf]
    %v354 = vld [vmem:[#allocation8 + $0x4] sm:$0xf]
    %v355 = vld [vmem:[#allocation8 + $0x8] sm:$0xf]
    %v356 = vld [vmem:[#allocation8 + $0xc] sm:$0xf]
    %v357 = vld [vmem:[#allocation8 + $0x10] sm:$0xf]
    %v358 = vld [vmem:[#allocation8 + $0x14] sm:$0xf]
    %v359 = vld [vmem:[#allocation8 + $0x18] sm:$0xf]
    %v360 = vld [vmem:[#allocation8 + $0x1c] sm:$0xf]
    %v361 = vld [vmem:[#allocation8 + $0x20] sm:$0xf]
    %v362 = vld [vmem:[#allocation8 + $0x24] sm:$0xf]
    %v363 = vld [vmem:[#allocation8 + $0x28] sm:$0xf]
    %v364 = vld [vmem:[#allocation8 + $0x2c] sm:$0xf]
    %v365 = vld [vmem:[#allocation8 + $0x30] sm:$0xf]
    %v366 = vld [vmem:[#allocation8 + $0x34] sm:$0xf]
    %v367 = vld [vmem:[#allocation8 + $0x38] sm:$0xf]
    %v368 = vld [vmem:[#allocation8 + $0x3c] sm:$0xf]
    %v369 = vld [vmem:[%s5] sm:$0x1]
    %v371 = vperm.slane %v369, 0
    %v389 = vunpack.c.l.b16 %v353
    %v390 = vunpack.c.l.b16 %v354
    %v391 = vunpack.c.l.b16 %v355
    %v392 = vunpack.c.l.b16 %v356
    %v393 = vunpack.c.l.b16 %v357
    %v394 = vunpack.c.l.b16 %v358
    %v395 = vunpack.c.l.b16 %v359
    %v396 = vunpack.c.l.b16 %v360
    %v397 = vunpack.c.l.b16 %v361
    %v398 = vunpack.c.l.b16 %v362
    %v399 = vunpack.c.l.b16 %v363
    %v400 = vunpack.c.l.b16 %v364
    %v401 = vunpack.c.l.b16 %v365
    %v402 = vunpack.c.l.b16 %v366
    %v403 = vunpack.c.l.b16 %v367
    %v404 = vunpack.c.l.b16 %v368
    %v405 = vpack.c.b16 %v390, %v389
    %v406 = vpack.c.b16 %v392, %v391
    %v407 = vpack.c.b16 %v394, %v393
    %v408 = vpack.c.b16 %v396, %v395
    %v409 = vpack.c.b16 %v398, %v397
    %v410 = vpack.c.b16 %v400, %v399
    %v411 = vpack.c.b16 %v402, %v401
    %v412 = vpack.c.b16 %v404, %v403
    %421 = vmatpush.bf16.msra.mxu0 %v412
    %422 = vmatpush.bf16.msra.mxu0 %v411
    %423 = vmatpush.bf16.msra.mxu0 %v410
    %424 = vmatpush.bf16.msra.mxu0 %v409
    %425 = vmatpush.bf16.msra.mxu0 %v408
    %426 = vmatpush.bf16.msra.mxu0 %v407
    %427 = vmatpush.bf16.msra.mxu0 %v406
    %428 = vmatpush.bf16.msra.mxu0 %v405
    %429 = vmatmul.bf16.gmra.mxu0 %v352
    %v430 = vpop.f32.mrf.mxu0
    %v431 = vadd.f32 %v371, %v430
    %v432 = vpop.f32.mrf.mxu0
    %v433 = vadd.f32 %v371, %v432
    %434 = vdwg.mxu0
    %435 = vst [vmem:[#allocation10] sm:$0xff] %v431
    %436 = vst [vmem:[#allocation10 + $0x8] sm:$0xff] %v433
    // Predicated region
    $region42: #{tpu_custom_call.1} parent=1 // pred_check
      _
    $region43: #{tpu_custom_call.1} parent=1 // pred_check_branch
      %438 = sbr.rel (0) target = $region45
    $region44: #{tpu_custom_call.1} parent=1 // pred_region
      %440 = vsyncadd [#allocation4], 0
      %s441 = sshll.u32 [#allocation10], 4
      %s442 = int_to_ptr.vmem [resolvable:$true] %s441
      %s443 = sshll.u32 %s6, 4
      %s444 = int_to_ptr.hbm [resolvable:$true] %s443
      %449 = dma.vmem_to_hbm [thread:$0]  %s442, 256, %s444, [#allocation4], 128, 128, 8
    $region45: #{tpu_custom_call.1} parent=1 // pred_fallthru
      _
    // Predicated region
    $region46: #{tpu_custom_call.1} parent=1 // pred_check
      _
    $region47: #{tpu_custom_call.1} parent=1 // pred_check_branch
      %451 = sbr.rel (0) target = $region49
    $region48: #{tpu_custom_call.1} parent=1 // pred_region
      %453 = dma.done [#allocation4], 256
    $region49: #{tpu_custom_call.1} parent=1 // pred_fallthru
      _
    %454 = vsyncpa [#allocation3], 1
    %455 = vsyncpa [#allocation6], 1
    %456 = vsyncpa [#allocation9], 1
    %457 = vsyncpa [#allocation4], 1

</llo_original>
